<compile_context>
chip_gen: v6e
topology: v6e:2x2x1
jax: 0.10.0
libtpu: 0.0.40
codegen_flags: <defaults>
</compile_context>

<pallas_src>
import math
import functools

import jax
import jax.numpy as jnp
from jax.experimental import pallas as pl
from jax.experimental.pallas import tpu as pltpu

_VMEM_LIMIT = 64 * 1024 * 1024  # raise the default scoped-VMEM limit (16 MiB on v5e)


def _pick_block_m(M, target=512):
    """Bounded row tile: whole array when small, otherwise `target` with a cdiv grid."""
    return M if M <= target else target


def _gelu_tanh(x):
    # TODO(synk): PyTorch nn.GELU default is erf-based; Mosaic has no erf lowering, so the
    # tanh approximation is used (max abs err ~3e-4).
    c = math.sqrt(2.0 / math.pi)
    return 0.5 * x * (1.0 + jnp.tanh(c * (x + 0.044715 * x * x * x)))


# ------------- fused linear: x @ w + b [-> gelu] [-> + residual] [-> layernorm] -------------

def _fused_linear_kernel(*refs, act, eps, has_residual, has_ln, n_chunk):
    x_ref, w_ref, b_ref = refs[0], refs[1], refs[2]
    idx = 3
    res_ref = None
    if has_residual:
        res_ref = refs[idx]
        idx += 1
    g_ref = beta_ref = None
    if has_ln:
        g_ref, beta_ref = refs[idx], refs[idx + 1]
        idx += 2
    o_ref = refs[idx]

    x = x_ref[...]
    N = w_ref.shape[1]

    if n_chunk > 1 and not has_ln and not has_residual:
        # Chunk the N axis so the bias/GELU epilogue of chunk j (VPU+EUP) overlaps the MXU
        # matmul of chunk j+1 instead of running serialized after one whole-N dot.
        nc = N // n_chunk
        for c in range(n_chunk):
            y = jnp.dot(x, w_ref[:, c * nc:(c + 1) * nc], preferred_element_type=jnp.float32)
            y = y + b_ref[:, c * nc:(c + 1) * nc]
            if act == "gelu":
                y = _gelu_tanh(y)
            o_ref[:, c * nc:(c + 1) * nc] = y.astype(o_ref.dtype)
        return

    y = jnp.dot(x, w_ref[...], preferred_element_type=jnp.float32)
    y = y + b_ref[...]
    if act == "gelu":
        # NOTE: on v6e/v7x this epilogue could run in bf16 (2x packed VPU/EUP); kept f32 so the
        # same kernel is correct/fast on v5e (no bf16 VPU/EUP).
        y = _gelu_tanh(y)
    if has_residual:
        y = y + res_ref[...].astype(jnp.float32)
    if has_ln:
        # single-pass mean/variance: one cross-lane reduction pair, no (bm, N) centering temp
        mu = jnp.mean(y, axis=-1, keepdims=True)
        var = jnp.mean(y * y, axis=-1, keepdims=True) - mu * mu
        y = (y - mu) * jax.lax.rsqrt(var + eps) * g_ref[...] + beta_ref[...]
    o_ref[...] = y.astype(o_ref.dtype)


def fused_linear(x, w, b, *, act=None, residual=None, ln=None, ln_eps=1e-12,
                 out_dtype=jnp.bfloat16, block_m=512):
    M, K = x.shape
    N = w.shape[1]
    bm = _pick_block_m(M, block_m)

    # NOTE: the weight/bias/LN specs are constant across the row grid; on jax versions with
    # BlockSpec(pipeline_mode=pl.Buffered(1)) they can be single-buffered to save VMEM (v7x).
    in_specs = [pl.BlockSpec((bm, K), lambda i: (i, 0)),
                pl.BlockSpec((K, N), lambda i: (0, 0)),
                pl.BlockSpec((1, N), lambda i: (0, 0))]
    args = [x, w, b.reshape(1, N).astype(jnp.float32)]
    if residual is not None:
        in_specs.append(pl.BlockSpec((bm, N), lambda i: (i, 0)))
        args.append(residual)
    if ln is not None:
        g, beta = ln
        in_specs += [pl.BlockSpec((1, N), lambda i: (0, 0)),
                     pl.BlockSpec((1, N), lambda i: (0, 0))]
        args += [g.reshape(1, N).astype(jnp.float32), beta.reshape(1, N).astype(jnp.float32)]

    n_chunk = N // 512 if (ln is None and residual is None and N > 512 and N % 512 == 0) else 1

    kernel = functools.partial(_fused_linear_kernel, act=act, eps=ln_eps,
                               has_residual=residual is not None, has_ln=ln is not None,
                               n_chunk=n_chunk)
    return pl.pallas_call(
        kernel,
        out_shape=jax.ShapeDtypeStruct((M, N), out_dtype),
        grid=(pl.cdiv(M, bm),),
        in_specs=in_specs,
        out_specs=pl.BlockSpec((bm, N), lambda i: (i, 0)),
        compiler_params=pltpu.CompilerParams(dimension_semantics=("parallel",),
                                             vmem_limit_bytes=_VMEM_LIMIT),
    )(*args)


# ---------------- embeddings: word + position + token-type adds fused into LayerNorm ----------------

def _embed_ln_kernel(w_ref, p_ref, t_ref, g_ref, b_ref, o_ref, *, eps):
    y = (w_ref[0].astype(jnp.float32) + p_ref[...].astype(jnp.float32)
         + t_ref[...].astype(jnp.float32))
    mu = jnp.mean(y, axis=-1, keepdims=True)
    var = jnp.mean(y * y, axis=-1, keepdims=True) - mu * mu
    o_ref[0] = ((y - mu) * jax.lax.rsqrt(var + eps) * g_ref[...] + b_ref[...]).astype(o_ref.dtype)


def embed_layernorm(word_rows, pos_emb, tok_row, g, b, *, eps=1e-12, out_dtype=jnp.bfloat16):
    B, S, E = word_rows.shape
    return pl.pallas_call(
        functools.partial(_embed_ln_kernel, eps=eps),
        out_shape=jax.ShapeDtypeStruct((B, S, E), out_dtype),
        grid=(B,),
        in_specs=[pl.BlockSpec((1, S, E), lambda i: (i, 0, 0)),
                  pl.BlockSpec((S, E), lambda i: (0, 0)),
                  pl.BlockSpec((1, E), lambda i: (0, 0)),
                  pl.BlockSpec((1, E), lambda i: (0, 0)),
                  pl.BlockSpec((1, E), lambda i: (0, 0))],
        out_specs=pl.BlockSpec((1, S, E), lambda i: (i, 0, 0)),
        compiler_params=pltpu.CompilerParams(dimension_semantics=("parallel",)),
    )(word_rows, pos_emb, tok_row,
      g.reshape(1, E).astype(jnp.float32), b.reshape(1, E).astype(jnp.float32))


# ------------------------- QKV projection (head-major output, per (batch, head)) -------------------------

def _qkv_proj_kernel(x_ref, w_ref, b_ref, o_ref):
    # (S, H) @ (H, 3*dh) for one (batch, head); attention scale already folded into Q weights.
    y = jnp.dot(x_ref[0], w_ref[0], preferred_element_type=jnp.float32) + b_ref[0]
    o_ref[0, 0] = y.astype(o_ref.dtype)


def qkv_projection(x, w_qkv, b_qkv, *, B, out_dtype=jnp.bfloat16):
    nheads, H, d3 = w_qkv.shape
    M = x.shape[0]
    S = M // B
    xb = x.reshape(B, S, H)
    return pl.pallas_call(
        _qkv_proj_kernel,
        out_shape=jax.ShapeDtypeStruct((B, nheads, S, d3), out_dtype),
        grid=(B, nheads),
        in_specs=[pl.BlockSpec((1, S, H), lambda b, h: (b, 0, 0)),    # resident across heads
                  pl.BlockSpec((1, H, d3), lambda b, h: (h, 0, 0)),
                  pl.BlockSpec((1, 1, d3), lambda b, h: (h, 0, 0))],
        out_specs=pl.BlockSpec((1, 1, S, d3), lambda b, h: (b, h, 0, 0)),
        compiler_params=pltpu.CompilerParams(dimension_semantics=("parallel", "arbitrary"),
                                             vmem_limit_bytes=_VMEM_LIMIT),
    )(xb, w_qkv, b_qkv)


# --------------------------------- self attention (one (batch, head) per step) ---------------------------------

def _attn_kernel(qkv_ref, bias_ref, o_ref, *, dh):
    qkv = qkv_ref[0, 0]                       # (S, 3*dh) bf16 slab for this (batch, head)
    q = qkv[:, :dh]                           # static slices of the per-head slab
    k = qkv[:, dh:2 * dh]
    v = qkv[:, 2 * dh:]
    s = jax.lax.dot_general(q, k, (((1,), (1,)), ((), ())),
                            preferred_element_type=jnp.float32)
    s = s + bias_ref[0]                       # additive attention-mask bias; scale is in Q
    m = jnp.max(s, axis=-1, keepdims=True)
    p = jnp.exp(s - m)
    p = p * pl.reciprocal(jnp.sum(p, axis=-1, keepdims=True), approx=True)
    o_ref[0, 0] = jnp.dot(p.astype(qkv.dtype), v,
                          preferred_element_type=jnp.float32).astype(o_ref.dtype)


def pallas_attention(qkv, bias, *, out_dtype=jnp.bfloat16):
    B, nheads, S, d3 = qkv.shape
    dh = d3 // 3
    # TODO(synk): for S >~ 2k add a KV grid axis with online softmax (flash) so the per-head
    # (S, S) f32 score tile stays within v7x's 64 MiB VMEM.
    return pl.pallas_call(
        functools.partial(_attn_kernel, dh=dh),
        out_shape=jax.ShapeDtypeStruct((B, nheads, S, dh), out_dtype),
        grid=(B, nheads),
        in_specs=[pl.BlockSpec((1, 1, S, d3), lambda b, h: (b, h, 0, 0)),
                  pl.BlockSpec((1, 1, S), lambda b, h: (b, 0, 0))],
        out_specs=pl.BlockSpec((1, 1, S, dh), lambda b, h: (b, h, 0, 0)),
        compiler_params=pltpu.CompilerParams(dimension_semantics=("parallel", "parallel"),
                                             vmem_limit_bytes=_VMEM_LIMIT),
    )(qkv, bias)


# ------------- attention output projection: sum_h ctx_h @ Wo_h, + bias + residual + LayerNorm -------------

def _attn_out_proj_kernel(ctx_ref, wo_ref, bo_ref, res_ref, g_ref, beta_ref, o_ref, acc_ref, *, eps):
    h = pl.program_id(1)

    @pl.when(h == 0)
    def _():
        acc_ref[...] = jnp.zeros_like(acc_ref)

    acc_ref[...] += jnp.dot(ctx_ref[0, 0], wo_ref[0], preferred_element_type=jnp.float32)

    @pl.when(h == pl.num_programs(1) - 1)
    def _():
        y = acc_ref[...] + bo_ref[...] + res_ref[0].astype(jnp.float32)
        mu = jnp.mean(y, axis=-1, keepdims=True)
        var = jnp.mean(y * y, axis=-1, keepdims=True) - mu * mu
        o_ref[0] = ((y - mu) * jax.lax.rsqrt(var + eps) * g_ref[...] + beta_ref[...]).astype(o_ref.dtype)


def attn_out_projection(ctx, wo, bo, residual, g, beta, *, ln_eps=1e-12, out_dtype=jnp.bfloat16):
    B, nheads, S, dh = ctx.shape
    H = wo.shape[-1]
    res = residual.reshape(B, S, H)
    grid_spec = pltpu.PrefetchScalarGridSpec(
        num_scalar_prefetch=0,
        grid=(B, nheads),
        in_specs=[pl.BlockSpec((1, 1, S, dh), lambda b, h: (b, h, 0, 0)),
                  pl.BlockSpec((1, dh, H), lambda b, h: (h, 0, 0)),
                  pl.BlockSpec((1, H), lambda b, h: (0, 0)),
                  pl.BlockSpec((1, S, H), lambda b, h: (b, 0, 0)),
                  pl.BlockSpec((1, H), lambda b, h: (0, 0)),
                  pl.BlockSpec((1, H), lambda b, h: (0, 0))],
        out_specs=pl.BlockSpec((1, S, H), lambda b, h: (b, 0, 0)),
        scratch_shapes=[pltpu.VMEM((S, H), jnp.float32)],
    )
    out = pl.pallas_call(
        functools.partial(_attn_out_proj_kernel, eps=ln_eps),
        grid_spec=grid_spec,
        out_shape=jax.ShapeDtypeStruct((B, S, H), out_dtype),
        compiler_params=pltpu.CompilerParams(dimension_semantics=("parallel", "arbitrary"),
                                             vmem_limit_bytes=_VMEM_LIMIT),
    )(ctx, wo, bo.reshape(1, H).astype(jnp.float32), res,
      g.reshape(1, H).astype(jnp.float32), beta.reshape(1, H).astype(jnp.float32))
    return out.reshape(B * S, H)


# --------------------- fused MLM cross-entropy + gumbel-argmax sampling ---------------------

def _loss_and_sample_kernel(logits_ref, labels_ref, noise_ref, loss_ref, sample_ref, acc_ref,
                            *, ignore_index, inv_temp, n_rows):
    i = pl.program_id(0)

    @pl.when(i == 0)
    def _():
        acc_ref[0] = 0.0
        acc_ref[1] = 0.0

    logits = logits_ref[...].astype(jnp.float32)             # (bm, C)
    labels = labels_ref[...]                                  # (bm, 1) int32
    bm, C = logits.shape
    cls = jax.lax.broadcasted_iota(jnp.int32, (bm, C), 1)
    row = jax.lax.broadcasted_iota(jnp.int32, (bm, 1), 0) + i * bm
    in_range = (row < n_rows).astype(jnp.float32)             # mask padded rows of the tail tile

    # cross entropy, mean over labels != ignore_index (matches F.cross_entropy(ignore_index=...),
    # including the 0/0 -> NaN behaviour when every label is ignored)
    m = jnp.max(logits, axis=-1, keepdims=True)
    lse = jnp.log(jnp.sum(jnp.exp(logits - m), axis=-1, keepdims=True)) + m
    picked = jnp.sum(jnp.where(cls == labels, logits, 0.0), axis=-1, keepdims=True)
    valid = (labels != ignore_index).astype(jnp.float32) * in_range
    acc_ref[0] += jnp.sum(jnp.where(valid > 0, lse - picked, 0.0))
    acc_ref[1] += jnp.sum(valid)

    # gumbel-argmax sampling over the class axis (torch _gumble_sample); the noise transform
    # runs on the EUP alongside the CE math.
    eps = float(jnp.finfo(jnp.float32).eps)
    g = -jnp.log(-jnp.log(noise_ref[...] + eps) + eps)
    s = logits * inv_temp + g
    smax = jnp.max(s, axis=-1, keepdims=True)
    sample_ref[...] = jnp.min(jnp.where(s == smax, cls, C), axis=-1, keepdims=True)  # first argmax

    @pl.when(i == pl.num_programs(0) - 1)
    def _():
        loss_ref[0, 0] = acc_ref[0] / acc_ref[1]


def pallas_loss_and_sample(logits, labels, noise, *, ignore_index, temp, block_m=512):
    M, C = logits.shape
    bm = _pick_block_m(M, block_m)
    grid_spec = pltpu.PrefetchScalarGridSpec(
        num_scalar_prefetch=0,
        grid=(pl.cdiv(M, bm),),
        in_specs=[pl.BlockSpec((bm, C), lambda i: (i, 0)),
                  pl.BlockSpec((bm, 1), lambda i: (i, 0)),
                  pl.BlockSpec((bm, C), lambda i: (i, 0))],
        out_specs=[pl.BlockSpec((1, 1), lambda i: (0, 0)),
                   pl.BlockSpec((bm, 1), lambda i: (i, 0))],
        scratch_shapes=[pltpu.SMEM((2,), jnp.float32)],
    )
    loss, sampled = pl.pallas_call(
        functools.partial(_loss_and_sample_kernel, ignore_index=ignore_index,
                          inv_temp=1.0 / float(temp), n_rows=M),
        grid_spec=grid_spec,
        out_shape=(jax.ShapeDtypeStruct((1, 1), jnp.float32),
                   jax.ShapeDtypeStruct((M, 1), jnp.int32)),
        compiler_params=pltpu.CompilerParams(dimension_semantics=("arbitrary",)),
    )(logits, labels, noise)
    return loss[0, 0], sampled


# ----------------------------------------- model glue -----------------------------------------

def init_params(key, cfg):
    V = cfg["vocab_size"]; E = cfg["embedding_size"]; H = cfg["hidden_size"]
    I = cfg["intermediate_size"]; P = cfg["max_position_embeddings"]
    L = cfg["num_hidden_layers"]; nheads = cfg["num_heads"]; dh = H // nheads
    scale = 1.0 / math.sqrt(dh)
    wdt = jnp.bfloat16                                    # MXU-native weight storage
    keys = iter(jax.random.split(key, 4 + 6 * L))
    nrm = lambda k, shape: 0.02 * jax.random.normal(k, shape, dtype=jnp.float32)
    params = {
        "word_emb": nrm(next(keys), (V, E)),
        "pos_emb": nrm(next(keys), (P, E)),
        "tok_type_emb": nrm(next(keys), (2, E)),
        "emb_ln_g": jnp.ones((E,), jnp.float32),
        "emb_ln_b": jnp.zeros((E,), jnp.float32),
        "head_dense_w": nrm(next(keys), (H, E)).astype(wdt),
        "head_dense_b": jnp.zeros((E,), jnp.float32),
        "head_ln_g": jnp.ones((E,), jnp.float32),
        "head_ln_b": jnp.zeros((E,), jnp.float32),
        "layers": [],
    }
    for _ in range(L):
        wq = nrm(next(keys), (H, H)).reshape(H, nheads, dh)
        wk = nrm(next(keys), (H, H)).reshape(H, nheads, dh)
        wv = nrm(next(keys), (H, H)).reshape(H, nheads, dh)
        # head-major packed QKV weights; 1/sqrt(dh) attention scale folded into the Q columns
        # (a nonzero Q bias would be scaled the same way) -> zero runtime cost.
        w_qkv = jnp.concatenate([wq * scale, wk, wv], axis=-1)       # (H, nheads, 3*dh)
        w_qkv = jnp.transpose(w_qkv, (1, 0, 2)).astype(wdt)          # (nheads, H, 3*dh)
        params["layers"].append({
            "w_qkv": w_qkv,
            "b_qkv": jnp.zeros((nheads, 1, 3 * dh), jnp.float32),
            "wo": nrm(next(keys), (H, H)).reshape(nheads, dh, H).astype(wdt),
            "bo": jnp.zeros((H,), jnp.float32),
            "ln1_g": jnp.ones((H,), jnp.float32), "ln1_b": jnp.zeros((H,), jnp.float32),
            "wi": nrm(next(keys), (H, I)).astype(wdt), "bi": jnp.zeros((I,), jnp.float32),
            "wf": nrm(next(keys), (I, H)).astype(wdt), "bf": jnp.zeros((H,), jnp.float32),
            "ln2_g": jnp.ones((H,), jnp.float32), "ln2_b": jnp.zeros((H,), jnp.float32),
        })
    return params


def electra_backbone(params, masked_ids, attention_mask, cfg):
    B, S = masked_ids.shape
    E = cfg["embedding_size"]; H = cfg["hidden_size"]
    M = B * S

    # embeddings: word gather (XLA) then pos + token-type adds fused into the LayerNorm kernel
    word = jnp.take(params["word_emb"], masked_ids, axis=0)                    # (B, S, E)
    x = embed_layernorm(word, params["pos_emb"][:S], params["tok_type_emb"][0:1],
                        params["emb_ln_g"], params["emb_ln_b"], eps=1e-12).reshape(M, E)
    # embeddings_project omitted because embedding_size == hidden_size (as in ElectraModel)

    bias = ((1.0 - attention_mask.astype(jnp.float32)) * -10000.0).reshape(B, 1, S)

    for layer in params["layers"]:
        qkv = qkv_projection(x, layer["w_qkv"], layer["b_qkv"], B=B)           # (B, nh, S, 3dh)
        ctx = pallas_attention(qkv, bias)                                       # (B, nh, S, dh)
        x = attn_out_projection(ctx, layer["wo"], layer["bo"], x,               # head-accumulated
                                layer["ln1_g"], layer["ln1_b"], ln_eps=1e-12)   #   + residual + LN1
        inter = fused_linear(x, layer["wi"], layer["bi"], act="gelu")           # FFN up + GELU
        x = fused_linear(inter, layer["wf"], layer["bf"],                       # FFN down + LN2
                         residual=x, ln=(layer["ln2_g"], layer["ln2_b"]), ln_eps=1e-12)
    return x                                                                    # (M, H) bf16


def electra_generator_forward(params, input_ids, attention_mask, special_tokens_mask, cfg, rng):
    B, S = input_ids.shape
    E = cfg["embedding_size"]
    M = B * S
    k_mask, k_noise = jax.random.split(rng)

    # _get_masked_text: dynamic masking — each non-special token masked w.p. mask_prob
    u = jax.random.uniform(k_mask, (B, S), dtype=jnp.float32)
    mask = (u < cfg["mask_prob"]) & (special_tokens_mask == 0)
    masked_ids = jnp.where(mask, cfg["mask_token_id"], input_ids)

    hidden = electra_backbone(params, masked_ids, attention_mask, cfg)          # (M, H) bf16

    # GeneratorHead: dense -> gelu -> layernorm, fused into one kernel; f32 logits out.
    h = fused_linear(hidden, params["head_dense_w"], params["head_dense_b"],
                     act="gelu", ln=(params["head_ln_g"], params["head_ln_b"]),
                     ln_eps=1e-5, out_dtype=jnp.float32)                        # (M, E)

    # As in the reference GeneratorHead, cross-entropy / sampling act directly on the
    # (., embedding_size) LayerNorm output — the spec has no E->V vocab projection.
    # TODO(synk): if a tied E->V LM head is added, fuse word_emb^T into the loss kernel with a
    # vocab grid axis + online logsumexp/argmax instead of materializing (M, V) f32 logits.
    labels = jnp.where(mask, input_ids, cfg["pad_token_id"]).reshape(M, 1).astype(jnp.int32)

    # TODO(synk): pltpu.prng_random_bits has no interpret/CPU lowering, so the uniform noise is
    # drawn with jax.random and streamed into the kernel; the clamp keeps -log(-log(u)) finite.
    eps32 = float(jnp.finfo(jnp.float32).eps)
    noise = jnp.minimum(jax.random.uniform(k_noise, (M, E), dtype=jnp.float32), 1.0 - 2.0 * eps32)

    loss, sampled = pallas_loss_and_sample(h, labels, noise,
                                           ignore_index=cfg["pad_token_id"],
                                           temp=cfg["temperature"])

    # TODO(synk): torch gathers only masked positions (dynamic shape); we return the gumbel
    # argmax for every position together with `mask` (same information, static shape).
    return {
        "last_hidden_state": h.reshape(B, S, E),
        "loss": loss,
        "sampled_tokens_ids": sampled.reshape(B, S),
        "mask": mask,
    }


# ------------------------------------------- driver -------------------------------------------

if __name__ == "__main__":
    cfg = dict(
        vocab_size=32, embedding_size=32, hidden_size=32,
        num_hidden_layers=2, num_heads=4, intermediate_size=64,
        max_position_embeddings=16,
        mask_prob=0.25, mask_token_id=3, pad_token_id=0, temperature=1.0,
    )
    B, S = 2, 8

    root = jax.random.PRNGKey(0)
    k_param, k_ids, k_fwd = jax.random.split(root, 3)
    params = init_params(k_param, cfg)

    input_ids = jax.random.randint(k_ids, (B, S), 4, cfg["vocab_size"], dtype=jnp.int32)
    attention_mask = jnp.ones((B, S), jnp.int32)
    special_tokens_mask = jnp.zeros((B, S), jnp.int32).at[:, 0].set(1)  # CLS-like token

    out = electra_generator_forward(params, input_ids, attention_mask,
                                    special_tokens_mask, cfg, k_fwd)
    jax.tree_util.tree_map(jax.block_until_ready, out)
    print("KERNEL_OK")
</pallas_src>

<mosaic_0001>
module attributes {stable_mosaic.version = 11 : i64} {
  func.func @_embed_ln_kernel(%arg0: i32, %arg1: memref<1x8x32xf32, #tpu.memory_space<vmem>>, %arg2: memref<8x32xf32, #tpu.memory_space<vmem>>, %arg3: memref<1x32xf32, #tpu.memory_space<vmem>>, %arg4: memref<1x32xf32, #tpu.memory_space<vmem>>, %arg5: memref<1x32xf32, #tpu.memory_space<vmem>>, %arg6: memref<1x8x32xbf16, #tpu.memory_space<vmem>>) attributes {dimension_semantics = [#tpu.dimension_semantics<parallel>], iteration_bounds = array<i64: 2>, scalar_prefetch = 0 : i64, scratch_operands = 0 : i64, tpu.core_type = #tpu.core_type<tc>, window_params = [{transform_indices = @transform_0, window_bounds = array<i64: 1, 8, 32>}, {pipeline_mode = #tpu.pipeline_mode<synchronous>, transform_indices = @transform_1, window_bounds = array<i64: 8, 32>}, {pipeline_mode = #tpu.pipeline_mode<synchronous>, transform_indices = @transform_2, window_bounds = array<i64: 1, 32>}, {pipeline_mode = #tpu.pipeline_mode<synchronous>, transform_indices = @transform_3, window_bounds = array<i64: 1, 32>}, {pipeline_mode = #tpu.pipeline_mode<synchronous>, transform_indices = @transform_4, window_bounds = array<i64: 1, 32>}, {transform_indices = @transform_5, window_bounds = array<i64: 1, 8, 32>}]} {
    %c0 = arith.constant 0 : index
    %c0_0 = arith.constant 0 : index
    %c0_1 = arith.constant 0 : index
    %0 = vector.load %arg1[%c0, %c0_0, %c0_1] : memref<1x8x32xf32, #tpu.memory_space<vmem>>, vector<1x8x32xf32>
    %1 = vector.shape_cast %0 : vector<1x8x32xf32> to vector<8x32xf32>
    %c0_2 = arith.constant 0 : index
    %c0_3 = arith.constant 0 : index
    %2 = vector.load %arg2[%c0_2, %c0_3] : memref<8x32xf32, #tpu.memory_space<vmem>>, vector<8x32xf32>
    %3 = arith.addf %1, %2 : vector<8x32xf32>
    %c0_4 = arith.constant 0 : index
    %c0_5 = arith.constant 0 : index
    %4 = vector.load %arg3[%c0_4, %c0_5] : memref<1x32xf32, #tpu.memory_space<vmem>>, vector<1x32xf32>
    %5 = vector.broadcast %4 : vector<1x32xf32> to vector<8x32xf32>
    %6 = arith.addf %3, %5 : vector<8x32xf32>
    %cst = arith.constant dense<0.000000e+00> : vector<8xf32>
    %7 = vector.multi_reduction <add>, %6, %cst [1] : vector<8x32xf32> to vector<8xf32>
    %8 = vector.shape_cast %7 : vector<8xf32> to vector<8x1xf32>
    %cst_6 = arith.constant 3.200000e+01 : f32
    %9 = vector.broadcast %cst_6 : f32 to vector<8x1xf32>
    %10 = arith.divf %8, %9 : vector<8x1xf32>
    %11 = arith.mulf %6, %6 : vector<8x32xf32>
    %cst_7 = arith.constant dense<0.000000e+00> : vector<8xf32>
    %12 = vector.multi_reduction <add>, %11, %cst_7 [1] : vector<8x32xf32> to vector<8xf32>
    %13 = vector.shape_cast %12 : vector<8xf32> to vector<8x1xf32>
    %cst_8 = arith.constant 3.200000e+01 : f32
    %14 = vector.broadcast %cst_8 : f32 to vector<8x1xf32>
    %15 = arith.divf %13, %14 : vector<8x1xf32>
    %16 = arith.mulf %10, %10 : vector<8x1xf32>
    %17 = arith.subf %15, %16 : vector<8x1xf32>
    %18 = vector.broadcast %10 : vector<8x1xf32> to vector<8x32xf32>
    %19 = arith.subf %6, %18 : vector<8x32xf32>
    %cst_9 = arith.constant 9.99999996E-13 : f32
    %20 = vector.broadcast %cst_9 : f32 to vector<8x1xf32>
    %21 = arith.addf %17, %20 : vector<8x1xf32>
    %22 = math.rsqrt %21 : vector<8x1xf32>
    %23 = vector.broadcast %22 : vector<8x1xf32> to vector<8x32xf32>
    %24 = arith.mulf %19, %23 : vector<8x32xf32>
    %c0_10 = arith.constant 0 : index
    %c0_11 = arith.constant 0 : index
    %25 = vector.load %arg4[%c0_10, %c0_11] : memref<1x32xf32, #tpu.memory_space<vmem>>, vector<1x32xf32>
    %26 = vector.broadcast %25 : vector<1x32xf32> to vector<8x32xf32>
    %27 = arith.mulf %24, %26 : vector<8x32xf32>
    %c0_12 = arith.constant 0 : index
    %c0_13 = arith.constant 0 : index
    %28 = vector.load %arg5[%c0_12, %c0_13] : memref<1x32xf32, #tpu.memory_space<vmem>>, vector<1x32xf32>
    %29 = vector.broadcast %28 : vector<1x32xf32> to vector<8x32xf32>
    %30 = arith.addf %27, %29 : vector<8x32xf32>
    %31 = arith.truncf %30 : vector<8x32xf32> to vector<8x32xbf16>
    %c0_14 = arith.constant 0 : index
    %c0_15 = arith.constant 0 : index
    %c0_16 = arith.constant 0 : index
    %32 = vector.load %arg6[%c0_14, %c0_15, %c0_16] : memref<1x8x32xbf16, #tpu.memory_space<vmem>>, vector<1x8x32xbf16>
    %33 = vector.shape_cast %32 : vector<1x8x32xbf16> to vector<8x32xbf16>
    %34 = vector.shape_cast %31 : vector<8x32xbf16> to vector<1x8x32xbf16>
    tpu.vector_store %arg6[%c0_14, %c0_15, %c0_16], %34 {strides = array<i32>} : memref<1x8x32xbf16, #tpu.memory_space<vmem>>, vector<1x8x32xbf16>,
    return
  }
  func.func @transform_0(%arg0: i32) -> (i32, i32, i32) {
    %c0_i32 = arith.constant 0 : i32
    %c0_i32_0 = arith.constant 0 : i32
    %c0_i32_1 = arith.constant 0 : i32
    return %arg0, %c0_i32, %c0_i32_0 : i32, i32, i32
  }
  func.func @transform_1(%arg0: i32) -> (i32, i32) {
    %c0_i32 = arith.constant 0 : i32
    %c0_i32_0 = arith.constant 0 : i32
    %c0_i32_1 = arith.constant 0 : i32
    return %c0_i32, %c0_i32_0 : i32, i32
  }
  func.func @transform_2(%arg0: i32) -> (i32, i32) {
    %c0_i32 = arith.constant 0 : i32
    %c0_i32_0 = arith.constant 0 : i32
    %c0_i32_1 = arith.constant 0 : i32
    return %c0_i32, %c0_i32_0 : i32, i32
  }
  func.func @transform_3(%arg0: i32) -> (i32, i32) {
    %c0_i32 = arith.constant 0 : i32
    %c0_i32_0 = arith.constant 0 : i32
    %c0_i32_1 = arith.constant 0 : i32
    return %c0_i32, %c0_i32_0 : i32, i32
  }
  func.func @transform_4(%arg0: i32) -> (i32, i32) {
    %c0_i32 = arith.constant 0 : i32
    %c0_i32_0 = arith.constant 0 : i32
    %c0_i32_1 = arith.constant 0 : i32
    return %c0_i32, %c0_i32_0 : i32, i32
  }
  func.func @transform_5(%arg0: i32) -> (i32, i32, i32) {
    %c0_i32 = arith.constant 0 : i32
    %c0_i32_0 = arith.constant 0 : i32
    %c0_i32_1 = arith.constant 0 : i32
    return %arg0, %c0_i32, %c0_i32_0 : i32, i32, i32
  }
}

</mosaic_0001>

<llo_original>
// kernel: tpu_custom_call.1
$region0: #{tpu_custom_call.1}
  #allocation0 [shape = 'u32[]', space=smem, size = 0x4, offset = 0x4, fixed_abs, tag = 'smem constant byte address 0x4 - core index']
  #allocation1 [shape = 'u32[144,128]{1,0:T(1,128)}', space=vmem, size = 0x12000, scoped, tag = 'internal scratch']
  %s0 = inlined_call_operand.hbm [shape: f32[2,8,32], index: 0, kind: input, shape index: {}]
  %s1 = inlined_call_operand.hbm [shape: f32[8,32], index: 1, kind: input, shape index: {}]
  %s2 = inlined_call_operand.vmem [shape: f32[1,32], index: 2, kind: input, shape index: {}]
  %s3 = inlined_call_operand.vmem [shape: f32[1,32], index: 3, kind: input, shape index: {}]
  %s4 = inlined_call_operand.vmem [shape: f32[1,32], index: 4, kind: input, shape index: {}]
  %s5 = inlined_call_operand.hbm [shape: bf16[2,8,32], index: 5, kind: output, shape index: {}]
  %s6 = sld [smem:[#allocation0]]
  $region61: #{tpu_custom_call.1} parent=0
    _
  %s8 = ssub.s32 1, %s6
  %s9 = scalar_select 0, %s8, %s6
  $region1: #{tpu_custom_call.1} parent=0
    #allocation2 [shape = 'u8[8192]{0}', space=vmem, size = 0x2000, scoped, tag = 'input window, operand 0']
    #allocation3 [shape = 's32[2]{0}', space=sflag, size = 0x8, scoped, tag = 'scoped memory for tpu_custom_call.1']
    #allocation4 [shape = 's32[2]{0}', space=sflag, size = 0x8, scoped, tag = 'scoped memory for tpu_custom_call.1']
    #allocation5 [shape = 'u8[4096]{0}', space=vmem, size = 0x1000, scoped, tag = 'input window, operand 1, single buffered']
    #allocation6 [shape = 's32[1]{0}', space=sflag, size = 0x4, scoped, tag = 'scoped memory for tpu_custom_call.1']
    #allocation7 [shape = 'u8[4096]{0}', space=vmem, size = 0x1000, scoped, tag = 'output window, operand 0']
    %10 = vsyncpa [#allocation3], 0
    %s11 = scalar_lea.sflag [#allocation3], 1
    %12 = vsyncpa %s11, 0
    %13 = vsyncpa [#allocation6], 0
    %14 = vsyncpa [#allocation4], 0
    %s15 = scalar_lea.sflag [#allocation4], 1
    %16 = vsyncpa %s15, 0
    loop: start=0, step=1, limit=4
    $region2: #{tpu_custom_call.1} parent=1 // loop_pre_header
      _
    $region3: #{tpu_custom_call.1} parent=1 // loop_header
      %s18 = sphi 0, %s22
      %p19 = scmp.ge.s32.totalorder %s18, 4
      %s28 = sphi 0, %s30
      %s31 = sphi 0, %s28
      %s32 = sphi 0, %s31
      %s48 = sphi 0, %s32
      %s52 = sphi 0, %s52
      %s54 = sphi 0, %s52
      %s55 = sphi 0, %s54
      %s69 = sphi 0, %s55
      %s73 = sphi 0, %s73
      %s75 = sphi 0, %s73
      %s76 = sphi 0, %s75
      %s90 = sphi 0, %s76
      %s94 = sphi 0, %s94
      %s96 = sphi 0, %s94
      %s97 = sphi 0, %s96
      %s111 = sphi 0, %s97
      %s115 = sphi 0, %s115
      %s117 = sphi 0, %s115
      %s118 = sphi 0, %s117
      %s132 = sphi 0, %s118
      %s138 = sphi 0, %s140
      %s141 = sphi 0, %s138
      %s142 = sphi 0, %s141
      %s158 = sphi 0, %s142
    $region4: #{tpu_custom_call.1} parent=1 // loop_header_branch
      %21 = sbr.rel (%p19) target = $region8
    $region5: #{tpu_custom_call.1} parent=1 // loop_body
      %s23 = ssub.s32 %s18, 1
      %s24 = ssub.s32 %s18, 2
      %s25 = sadd.s32 %s18, 1
      %s26 = ssub.s32 %s18, %s25
      %p27 = scmp.eq.s32.totalorder %s26, 0
      %s29 = sadd.s32 %s28, 1
      %s30 = scalar_select %p27, %s28, %s29
      %p33 = pneg %p27
      %p34 = scmp.eq.s32.totalorder %s18, 1
      %p35 = por %p33, %p34
      %p36 = scmp.ne.s32.totalorder %s28, %s31
      %p37 = scmp.eq.s32.totalorder %s18, 0
      %p38 = por %p36, %p37
      %p39 = scmp.ne.s32.totalorder %s28, %s31
      %p40 = scmp.eq.s32.totalorder %s23, 1
      %p41 = por %p39, %p40
      %p42 = scmp.ne.s32.totalorder %s31, %s32
      %p43 = scmp.eq.s32.totalorder %s23, 0
      %p44 = por %p42, %p43
      %p45 = scmp.ne.s32.totalorder %s31, %s32
      %p46 = scmp.eq.s32.totalorder %s24, 1
      %p47 = por %p45, %p46
      %p49 = scmp.ne.s32.totalorder %s32, %s48
      %p50 = scmp.eq.s32.totalorder %s24, 0
      %p51 = por %p49, %p50
      %s53 = sadd.s32 %s52, 1
      %p56 = scmp.eq.s32.totalorder %s18, 1
      %p57 = scmp.ne.s32.totalorder %s52, %s54
      %p58 = scmp.eq.s32.totalorder %s18, 0
      %p59 = por %p57, %p58
      %p60 = scmp.ne.s32.totalorder %s52, %s54
      %p61 = scmp.eq.s32.totalorder %s23, 1
      %p62 = por %p60, %p61
      %p63 = scmp.ne.s32.totalorder %s54, %s55
      %p64 = scmp.eq.s32.totalorder %s23, 0
      %p65 = por %p63, %p64
      %p66 = scmp.ne.s32.totalorder %s54, %s55
      %p67 = scmp.eq.s32.totalorder %s24, 1
      %p68 = por %p66, %p67
      %p70 = scmp.ne.s32.totalorder %s55, %s69
      %p71 = scmp.eq.s32.totalorder %s24, 0
      %p72 = por %p70, %p71
      %s74 = sadd.s32 %s73, 1
      %p77 = scmp.eq.s32.totalorder %s18, 1
      %p78 = scmp.ne.s32.totalorder %s73, %s75
      %p79 = scmp.eq.s32.totalorder %s18, 0
      %p80 = por %p78, %p79
      %p81 = scmp.ne.s32.totalorder %s73, %s75
      %p82 = scmp.eq.s32.totalorder %s23, 1
      %p83 = por %p81, %p82
      %p84 = scmp.ne.s32.totalorder %s75, %s76
      %p85 = scmp.eq.s32.totalorder %s23, 0
      %p86 = por %p84, %p85
      %p87 = scmp.ne.s32.totalorder %s75, %s76
      %p88 = scmp.eq.s32.totalorder %s24, 1
      %p89 = por %p87, %p88
      %p91 = scmp.ne.s32.totalorder %s76, %s90
      %p92 = scmp.eq.s32.totalorder %s24, 0
      %p93 = por %p91, %p92
      %s95 = sadd.s32 %s94, 1
      %p98 = scmp.eq.s32.totalorder %s18, 1
      %p99 = scmp.ne.s32.totalorder %s94, %s96
      %p100 = scmp.eq.s32.totalorder %s18, 0
      %p101 = por %p99, %p100
      %p102 = scmp.ne.s32.totalorder %s94, %s96
      %p103 = scmp.eq.s32.totalorder %s23, 1
      %p104 = por %p102, %p103
      %p105 = scmp.ne.s32.totalorder %s96, %s97
      %p106 = scmp.eq.s32.totalorder %s23, 0
      %p107 = por %p105, %p106
      %p108 = scmp.ne.s32.totalorder %s96, %s97
      %p109 = scmp.eq.s32.totalorder %s24, 1
      %p110 = por %p108, %p109
      %p112 = scmp.ne.s32.totalorder %s97, %s111
      %p113 = scmp.eq.s32.totalorder %s24, 0
      %p114 = por %p112, %p113
      %s116 = sadd.s32 %s115, 1
      %p119 = scmp.eq.s32.totalorder %s18, 1
      %p120 = scmp.ne.s32.totalorder %s115, %s117
      %p121 = scmp.eq.s32.totalorder %s18, 0
      %p122 = por %p120, %p121
      %p123 = scmp.ne.s32.totalorder %s115, %s117
      %p124 = scmp.eq.s32.totalorder %s23, 1
      %p125 = por %p123, %p124
      %p126 = scmp.ne.s32.totalorder %s117, %s118
      %p127 = scmp.eq.s32.totalorder %s23, 0
      %p128 = por %p126, %p127
      %p129 = scmp.ne.s32.totalorder %s117, %s118
      %p130 = scmp.eq.s32.totalorder %s24, 1
      %p131 = por %p129, %p130
      %p133 = scmp.ne.s32.totalorder %s118, %s132
      %p134 = scmp.eq.s32.totalorder %s24, 0
      %p135 = por %p133, %p134
      %s136 = ssub.s32 %s18, %s25
      %p137 = scmp.eq.s32.totalorder %s136, 0
      %s139 = sadd.s32 %s138, 1
      %s140 = scalar_select %p137, %s138, %s139
      %p143 = pneg %p137
      %p144 = scmp.eq.s32.totalorder %s18, 1
      %p145 = por %p143, %p144
      %p146 = scmp.ne.s32.totalorder %s138, %s141
      %p147 = scmp.eq.s32.totalorder %s18, 0
      %p148 = por %p146, %p147
      %p149 = scmp.ne.s32.totalorder %s138, %s141
      %p150 = scmp.eq.s32.totalorder %s23, 1
      %p151 = por %p149, %p150
      %p152 = scmp.ne.s32.totalorder %s141, %s142
      %p153 = scmp.eq.s32.totalorder %s23, 0
      %p154 = por %p152, %p153
      %p155 = scmp.ne.s32.totalorder %s141, %s142
      %p156 = scmp.eq.s32.totalorder %s24, 1
      %p157 = por %p155, %p156
      %p159 = scmp.ne.s32.totalorder %s142, %s158
      %p160 = scmp.eq.s32.totalorder %s24, 0
      %p161 = por %p159, %p160
      %p162 = scmp.le.s32.totalorder 1, %s18
      %p163 = scmp.lt.s32.totalorder %s18, 3
      %p164 = pnand %p162, %p163
      %p165 = pneg %p164
      // Predicated region
      $region9: #{tpu_custom_call.1} parent=5 // pred_check
        _
      $region10: #{tpu_custom_call.1} parent=5 // pred_check_branch
        %167 = sbr.rel (%p164) target = $region12
      $region11: #{tpu_custom_call.1} parent=5 // pred_region
        %s168 = ssub.s32 %s18, 1
        // Predicated region
        $region13: #{tpu_custom_call.1} parent=11 // pred_check
          %p169 = pneg %p65
        $region14: #{tpu_custom_call.1} parent=11 // pred_check_branch
          %171 = sbr.rel (%p169) target = $region16
        $region15: #{tpu_custom_call.1} parent=11 // pred_region
          %s173 = ssub.s32 128, 128
          %174 = vsyncadd [#allocation6], %s173
          %s176 = sshll.u32 [#allocation5], 4
          %s177 = int_to_ptr.vmem [resolvable:$true] %s176
          %179 = dma.hbm_to_vmem [thread:$0]  %s1, 128, %s177, [#allocation6]
        $region16: #{tpu_custom_call.1} parent=11 // pred_fallthru
          _
        // Predicated region
        $region17: #{tpu_custom_call.1} parent=11 // pred_check
          %p180 = pneg %p86
        $region18: #{tpu_custom_call.1} parent=11 // pred_check_branch
          %182 = sbr.rel (%p180) target = $region20
        $region19: #{tpu_custom_call.1} parent=11 // pred_region
          _
        $region20: #{tpu_custom_call.1} parent=11 // pred_fallthru
          _
        // Predicated region
        $region21: #{tpu_custom_call.1} parent=11 // pred_check
          %p183 = pneg %p107
        $region22: #{tpu_custom_call.1} parent=11 // pred_check_branch
          %185 = sbr.rel (%p183) target = $region24
        $region23: #{tpu_custom_call.1} parent=11 // pred_region
          _
        $region24: #{tpu_custom_call.1} parent=11 // pred_fallthru
          _
        // Predicated region
        $region25: #{tpu_custom_call.1} parent=11 // pred_check
          %p186 = pneg %p128
        $region26: #{tpu_custom_call.1} parent=11 // pred_check_branch
          %188 = sbr.rel (%p186) target = $region28
        $region27: #{tpu_custom_call.1} parent=11 // pred_region
          _
        $region28: #{tpu_custom_call.1} parent=11 // pred_fallthru
          _
      $region12: #{tpu_custom_call.1} parent=5 // pred_fallthru
        _
      %p189 = scmp.lt.s32.totalorder %s18, 2
      // Predicated region
      $region29: #{tpu_custom_call.1} parent=5 // pred_check
        %p190 = pneg %p189
      $region30: #{tpu_custom_call.1} parent=5 // pred_check_branch
        %192 = sbr.rel (%p190) target = $region32
      $region31: #{tpu_custom_call.1} parent=5 // pred_region
        // Predicated region
        $region33: #{tpu_custom_call.1} parent=31 // pred_check
          %p193 = pneg %p38
        $region34: #{tpu_custom_call.1} parent=31 // pred_check_branch
          %195 = sbr.rel (%p193) target = $region36
        $region35: #{tpu_custom_call.1} parent=31 // pred_region
          %s196 = sand.u32 %s28, 1
          %s197 = scalar_lea.sflag [#allocation3], %s196
          %s198 = sand.u32 %s28, 1
          %s199 = smul.addr %s198, 8
          %s200 = scalar_lea.vmem [#allocation2], %s199
          %s202 = ssub.s32 128, 128
          %203 = vsyncadd %s197, %s202
          %s204 = smul.addr %s18, 128
          %s205 = scalar_lea.hbm %s0, %s204
          %s207 = sshll.u32 %s200, 4
          %s208 = int_to_ptr.vmem [resolvable:$true] %s207
          %210 = dma.hbm_to_vmem [thread:$0]  %s205, 128, %s208, %s197
        $region36: #{tpu_custom_call.1} parent=31 // pred_fallthru
          _
      $region32: #{tpu_custom_call.1} parent=5 // pred_fallthru
        _
      %p211 = scmp.le.s32.totalorder 1, %s18
      %p212 = scmp.lt.s32.totalorder %s18, 3
      %p213 = pnand %p211, %p212
      %p214 = pneg %p213
      // Predicated region
      $region37: #{tpu_custom_call.1} parent=5 // pred_check
        _
      $region38: #{tpu_custom_call.1} parent=5 // pred_check_branch
        %216 = sbr.rel (%p213) target = $region40
      $region39: #{tpu_custom_call.1} parent=5 // pred_region
        %s217 = ssub.s32 %s18, 1
        %s218 = sand.u32 %s31, 1
        %s219 = scalar_lea.sflag [#allocation3], %s218
        %s220 = sand.u32 %s31, 1
        %s221 = smul.addr %s220, 8
        %s222 = scalar_lea.vmem [#allocation2], %s221
        // Predicated region
        $region41: #{tpu_custom_call.1} parent=39 // pred_check
          %p223 = pneg %p44
        $region42: #{tpu_custom_call.1} parent=39 // pred_check_branch
          %225 = sbr.rel (%p223) target = $region44
        $region43: #{tpu_custom_call.1} parent=39 // pred_region
          %226 = dma.done %s219, 128
        $region44: #{tpu_custom_call.1} parent=39 // pred_fallthru
          _
        // Predicated region
        $region45: #{tpu_custom_call.1} parent=39 // pred_check
          %p227 = pneg %p65
        $region46: #{tpu_custom_call.1} parent=39 // pred_check_branch
          %229 = sbr.rel (%p227) target = $region48
        $region47: #{tpu_custom_call.1} parent=39 // pred_region
          %230 = dma.done [#allocation6], 128
        $region48: #{tpu_custom_call.1} parent=39 // pred_fallthru
          _
        %s231 = sand.u32 %s31, 1
        %s232 = scalar_lea.sflag [#allocation3], %s231
        %s233 = sand.u32 %s31, 1
        %s234 = smul.addr %s233, 8
        %s235 = scalar_lea.vmem [#allocation2], %s234
        %p236 = pneg %p44
        %p237 = pneg %p41
        %p238 = pneg %p65
        %p239 = pneg %p62
        %p240 = pneg %p86
        %p241 = pneg %p83
        %p242 = pneg %p107
        %p243 = pneg %p104
        %p244 = pneg %p128
        %p245 = pneg %p125
        %p246 = pneg %p154
        %p247 = pneg %p151
        %s248 = sand.u32 %s141, 1
        %s249 = scalar_lea.sflag [#allocation4], %s248
        %s250 = sand.u32 %s141, 1
        %s251 = smul.addr %s250, 4
        %s252 = scalar_lea.vmem [#allocation7], %s251
        %v253 = vld [vmem:[%s222] sm:$0xff]
        %v254 = vld [vmem:[#allocation5] sm:$0xff]
        %v255 = vadd.f32 %v253, %v254
        %v256 = vld [vmem:[%s2] sm:$0x1]
        %v258 = vlaneseq
        %v259 = vshrl.u32 %v258, 7
        %v260 = vsub.s32 0, %v259
        %v261 = vrot.slane %v256, %v260
        %v263 = vadd.f32 %v255, %v261
        %vm264 = vcmask 261120
        %v265 = vsel %vm264, %v263, 0.0
        %266 = vadd.xlane.f32.xlu0 %v265
        %v267 = vpop.xlane.xlu0 %266
        %v268 = vrcp.pop 32.0
        %v269 = vmul.f32 %v267, %v268
        %v270 = vmul.f32 %v263, %v263
        %v271 = vsel %vm264, %v270, 0.0
        %272 = vadd.xlane.f32.xlu0 %v271
        %v273 = vpop.xlane.xlu0 %272
        %v274 = vmul.f32 %v273, %v268
        %v275 = vmul.f32 %v269, %v269
        %v276 = vsub.f32 %v274, %v275
        %v277 = vsub.f32 %v263, %v269
        %v278 = vadd.f32 %v276, 1e-12
        %v279 = vrsqrt.pop %v278
        %v280 = vmul.f32 %v277, %v279
        %v281 = vld [vmem:[%s3] sm:$0x1]
        %v283 = vlaneseq
        %v284 = vshrl.u32 %v283, 7
        %v285 = vsub.s32 0, %v284
        %v286 = vrot.slane %v281, %v285
        %v288 = vmul.f32 %v280, %v286
        %v289 = vld [vmem:[%s4] sm:$0x1]
        %v291 = vlaneseq
        %v292 = vshrl.u32 %v291, 7
        %v293 = vsub.s32 0, %v292
        %v294 = vrot.slane %v289, %v293
        %v296 = vadd.f32 %v288, %v294
        %v297 = vpack.c.bf16 %v296, %v296
        %vm298 = vcmask 257024
        %299 = vst.msk [vmem:[%s252] sm:$0xf] %vm298, %v297
        %s300 = sand.u32 %s141, 1
        %s301 = scalar_lea.sflag [#allocation4], %s300
        %s302 = sand.u32 %s141, 1
        %s303 = smul.addr %s302, 4
        %s304 = scalar_lea.vmem [#allocation7], %s303
        // Predicated region
        $region49: #{tpu_custom_call.1} parent=39 // pred_check
          %p305 = pneg %p151
        $region50: #{tpu_custom_call.1} parent=39 // pred_check_branch
          %307 = sbr.rel (%p305) target = $region52
        $region51: #{tpu_custom_call.1} parent=39 // pred_region
          %s309 = ssub.s32 64, 64
          %310 = vsyncadd %s301, %s309
          %s311 = smul.addr %s23, 64
          %s312 = scalar_lea.hbm %s5, %s311
          %s314 = sshll.u32 %s304, 4
          %s315 = int_to_ptr.vmem [resolvable:$true] %s314
          %317 = dma.vmem_to_hbm [thread:$0]  %s315, 64, %s312, %s301
        $region52: #{tpu_custom_call.1} parent=39 // pred_fallthru
          _
      $region40: #{tpu_custom_call.1} parent=5 // pred_fallthru
        _
      %p318 = scmp.le.s32.totalorder 2, %s18
      // Predicated region
      $region53: #{tpu_custom_call.1} parent=5 // pred_check
        %p319 = pneg %p318
      $region54: #{tpu_custom_call.1} parent=5 // pred_check_branch
        %321 = sbr.rel (%p319) target = $region56
      $region55: #{tpu_custom_call.1} parent=5 // pred_region
        %s322 = ssub.s32 %s18, 2
        // Predicated region
        $region57: #{tpu_custom_call.1} parent=55 // pred_check
          %p323 = pneg %p157
        $region58: #{tpu_custom_call.1} parent=55 // pred_check_branch
          %325 = sbr.rel (%p323) target = $region60
        $region59: #{tpu_custom_call.1} parent=55 // pred_region
          %s326 = sand.u32 %s142, 1
          %s327 = scalar_lea.sflag [#allocation4], %s326
          %s328 = sand.u32 %s142, 1
          %s329 = smul.addr %s328, 4
          %s330 = scalar_lea.vmem [#allocation7], %s329
          %331 = dma.done %s327, 64
        $region60: #{tpu_custom_call.1} parent=55 // pred_fallthru
          _
      $region56: #{tpu_custom_call.1} parent=5 // pred_fallthru
        _
    $region6: #{tpu_custom_call.1} parent=1 // loop_footer
      %s22 = sadd.s32 1, %s18
    $region7: #{tpu_custom_call.1} parent=1 // loop_footer_branch
      %17 = sbr.rel target = $region3
    $region8: #{tpu_custom_call.1} parent=1 // loop_exit
      _
    %332 = vsyncpa [#allocation3], 1
    %s333 = scalar_lea.sflag [#allocation3], 1
    %334 = vsyncpa %s333, 1
    %335 = vsyncpa [#allocation6], 1
    %336 = vsyncpa [#allocation4], 1
    %s337 = scalar_lea.sflag [#allocation4], 1
    %338 = vsyncpa %s337, 1

</llo_original>
